<compile_context>
chip_gen: v6e
topology: v6e:2x2x1
jax: 0.10.0
libtpu: 0.0.40
codegen_flags: <defaults>
</compile_context>

<pallas_src>
import functools

import numpy as np
import jax
import jax.numpy as jnp
from jax.experimental import pallas as pl
from jax.experimental.pallas import tpu as pltpu


# ----------------------------------------------------------------------------
# Host-side constants
# ----------------------------------------------------------------------------

def _gaussian_window(win_size: int, sigma: float) -> np.ndarray:
    # Matches pytorch_msssim._fspecial_gauss_1d
    coords = np.arange(win_size, dtype=np.float64) - win_size // 2
    g = np.exp(-(coords ** 2) / (2.0 * sigma ** 2))
    return (g / g.sum()).astype(np.float32)


def _row_band_matrix(h: int, gw: np.ndarray) -> np.ndarray:
    """(Ho, H) so that (M @ a)[i, :] = sum_k gw[k] * a[i + k, :]."""
    win = gw.shape[0]
    ho = h - win + 1
    mh = np.zeros((ho, h), np.float32)
    for i in range(ho):
        mh[i, i:i + win] = gw
    return mh


def _col_band_blockdiag(w: int, gw: np.ndarray, planes: int) -> np.ndarray:
    """Block-diagonal (P*W, P*Wo): column-pass filter applied per packed plane."""
    win = gw.shape[0]
    wo = w - win + 1
    nw = np.zeros((w, wo), np.float32)
    for j in range(wo):
        nw[j:j + win, j] = gw
    big = np.zeros((planes * w, planes * wo), np.float32)
    for p in range(planes):
        big[p * w:(p + 1) * w, p * wo:(p + 1) * wo] = nw
    return big


# ----------------------------------------------------------------------------
# VMEM-aware plane batching
# ----------------------------------------------------------------------------

def _vmem_bytes_estimate(p: int, h: int, w: int, ho: int, wo: int) -> int:
    f = 4  # f32
    inputs = 2 * 2 * h * (p * w) * f                 # x,y blocks, double-buffered
    consts = 2 * ho * h * f + 2 * (p * w) * (p * wo) * f  # mh, nw (2 buffers each)
    inter = (5 * h * p * w          # concat A
             + 5 * ho * p * w       # row-pass result
             + 16 * ho * p * wo) * f  # column results + elementwise temps
    out = 2 * 8 * 128 * f
    return inputs + consts + inter + out


def _choose_planes_per_step(n: int, h: int, w: int, ho: int, wo: int,
                            budget_bytes: int, max_planes: int = 8) -> int:
    """Largest divisor of n that fits the VMEM budget and keeps >=2 grid steps."""
    cap = n if n < 2 else max(1, n // 2)  # keep both v7x TensorCores busy
    best = 1
    for p in range(1, n + 1):
        if n % p or p > max_planes or p > cap:
            continue
        if _vmem_bytes_estimate(p, h, w, ho, wo) <= budget_bytes:
            best = p
    return best


# ----------------------------------------------------------------------------
# Kernel
# ----------------------------------------------------------------------------

def _ssim_kernel(x_ref, y_ref, mh_ref, nwb_ref, out_ref, *,
                 planes, w, wo, c1, c2):
    pw = planes * w

    x = x_ref[0].astype(jnp.float32)     # (H, P*W), planes packed along lanes
    y = y_ref[0].astype(jnp.float32)
    mh = mh_ref[...]                     # (Ho, H)
    nwb = nwb_ref[...]                   # (P*W, P*Wo) block-diagonal

    # Fused row pass: one MXU matmul over all 5 maps.
    a = jnp.concatenate([x, y, x * x, y * y, x * y], axis=1)   # (H, 5*P*W)
    t = jnp.dot(mh, a, preferred_element_type=jnp.float32)     # (Ho, 5*P*W)

    def col(seg):                                              # (Ho, P*Wo)
        return jnp.dot(t[:, seg * pw:(seg + 1) * pw], nwb,
                       preferred_element_type=jnp.float32)

    mu1, mu2, sxx, syy, sxy = col(0), col(1), col(2), col(3), col(4)

    mu1_sq = mu1 * mu1
    mu2_sq = mu2 * mu2
    mu1_mu2 = mu1 * mu2
    sigma1_sq = sxx - mu1_sq            # compensation == 1.0
    sigma2_sq = syy - mu2_sq
    sigma12 = sxy - mu1_mu2

    cs_map = (2.0 * sigma12 + c2) * pl.reciprocal(
        sigma1_sq + sigma2_sq + c2, approx=True)
    lum = (2.0 * mu1_mu2 + c1) * pl.reciprocal(
        mu1_sq + mu2_sq + c1, approx=True)
    ssim_map = lum * cs_map             # (Ho, P*Wo), lane-dense elementwise

    total = jnp.sum(ssim_map)
    # Per-grid-step partial sum written to an aligned (8,128) tile so the grid
    # axis stays fully parallel (no cross-step accumulator).
    out_ref[...] = jnp.broadcast_to(total, out_ref.shape).astype(jnp.float32)


# ----------------------------------------------------------------------------
# Wrapper
# ----------------------------------------------------------------------------

def ssim_loss(x, y, *, win_size=7, sigma=1.5, data_range=1.0,
              k1=0.01, k2=0.03):
    assert x.shape == y.shape and x.ndim == 4, "expected NCHW inputs"
    B, C, H, W = x.shape
    assert H >= win_size and W >= win_size

    N = B * C
    Ho, Wo = H - win_size + 1, W - win_size + 1
    gw = _gaussian_window(win_size, sigma)
    c1 = float((k1 * data_range) ** 2)
    c2 = float((k2 * data_range) ** 2)

    # Generation-aware VMEM budget (128 MiB on v5e/v6e, 64 MiB/TC on v7x).
    try:
        vmem_cap = int(pltpu.get_tpu_info().vmem_capacity_bytes)
    except Exception:
        vmem_cap = 64 * 1024 * 1024
    budget_bytes = int(0.5 * vmem_cap)
    vmem_limit = min(int(0.75 * vmem_cap), 100 * 1024 * 1024)

    P = _choose_planes_per_step(N, H, W, Ho, Wo, budget_bytes)
    G = N // P

    # Pack P planes along the lane axis: (G, H, P*W).
    def pack(a):
        return (a.reshape(G, P, H, W)
                 .transpose(0, 2, 1, 3)
                 .reshape(G, H, P * W)
                 .astype(jnp.float32))

    xr, yr = pack(x), pack(y)
    mh = jnp.asarray(_row_band_matrix(H, gw))
    nwb = jnp.asarray(_col_band_blockdiag(W, gw, P))

    kernel = functools.partial(_ssim_kernel, planes=P, w=W, wo=Wo, c1=c1, c2=c2)

    flops = N * (2 * Ho * H * 5 * W + 5 * 2 * Ho * W * Wo + 30 * Ho * Wo)
    bytes_accessed = (2 * N * H * W + Ho * H + (P * W) * (P * Wo) + G * 8 * 128) * 4
    transcendentals = 2 * N * Ho * Wo

    out = pl.pallas_call(
        kernel,
        out_shape=jax.ShapeDtypeStruct((G, 8, 128), jnp.float32),
        grid_spec=pltpu.PrefetchScalarGridSpec(
            num_scalar_prefetch=0,
            grid=(G,),
            in_specs=[
                pl.BlockSpec((1, H, P * W), lambda g: (g, 0, 0)),
                pl.BlockSpec((1, H, P * W), lambda g: (g, 0, 0)),
                pl.BlockSpec((Ho, H), lambda g: (0, 0)),          # resident const
                pl.BlockSpec((P * W, P * Wo), lambda g: (0, 0)),  # resident const
            ],
            out_specs=pl.BlockSpec((1, 8, 128), lambda g: (g, 0, 0)),
        ),
        compiler_params=pltpu.CompilerParams(
            dimension_semantics=("parallel",),
            vmem_limit_bytes=vmem_limit,
        ),
        cost_estimate=pl.CostEstimate(
            flops=int(flops),
            transcendentals=int(transcendentals),
            bytes_accessed=int(bytes_accessed),
        ),
    )(xr, yr, mh, nwb)

    total = jnp.sum(out[:, 0, 0])
    mean_ssim = total / jnp.float32(N * Ho * Wo)
    return (1.0 - mean_ssim).astype(jnp.float32)


# ----------------------------------------------------------------------------
# Pure-JAX reference (matches pytorch_msssim) for the sanity check
# ----------------------------------------------------------------------------

def _ssim_loss_ref(x, y, *, win_size=7, sigma=1.5, data_range=1.0,
                   k1=0.01, k2=0.03):
    gw = jnp.asarray(_gaussian_window(win_size, sigma))
    c1 = (k1 * data_range) ** 2
    c2 = (k2 * data_range) ** 2
    B, C, H, W = x.shape
    xf = x.reshape(B * C, H, W).astype(jnp.float32)
    yf = y.reshape(B * C, H, W).astype(jnp.float32)
    ho, wo = H - win_size + 1, W - win_size + 1

    def filt(a):
        t = sum(gw[k] * a[:, k:k + ho, :] for k in range(win_size))
        return sum(gw[k] * t[:, :, k:k + wo] for k in range(win_size))

    mu1, mu2 = filt(xf), filt(yf)
    sxx, syy, sxy = filt(xf * xf), filt(yf * yf), filt(xf * yf)
    s1 = sxx - mu1 * mu1
    s2 = syy - mu2 * mu2
    s12 = sxy - mu1 * mu2
    cs = (2.0 * s12 + c2) / (s1 + s2 + c2)
    ssim_map = ((2.0 * mu1 * mu2 + c1) / (mu1 * mu1 + mu2 * mu2 + c1)) * cs
    return 1.0 - jnp.mean(ssim_map)


if __name__ == "__main__":
    key = jax.random.PRNGKey(0)
    kx, ky = jax.random.split(key)
    B, C, H, W = 2, 3, 16, 16            # channel=3 per module __init__
    x = jax.random.uniform(kx, (B, C, H, W), dtype=jnp.float32)  # data_range=1
    y = jax.random.uniform(ky, (B, C, H, W), dtype=jnp.float32)

    loss = jax.block_until_ready(ssim_loss(x, y))
    ref = jax.block_until_ready(_ssim_loss_ref(x, y))

    assert loss.shape == () and jnp.isfinite(loss)
    assert abs(float(loss) - float(ref)) < 2e-3, (float(loss), float(ref))
    print("KERNEL_OK")
</pallas_src>

<mosaic_0001>
module attributes {stable_mosaic.version = 11 : i64} {
  func.func @_ssim_kernel(%arg0: i32, %arg1: memref<1x16x48xf32, #tpu.memory_space<vmem>>, %arg2: memref<1x16x48xf32, #tpu.memory_space<vmem>>, %arg3: memref<10x16xf32, #tpu.memory_space<vmem>>, %arg4: memref<48x30xf32, #tpu.memory_space<vmem>>, %arg5: memref<1x8x128xf32, #tpu.memory_space<vmem>>) attributes {dimension_semantics = [#tpu.dimension_semantics<parallel>], iteration_bounds = array<i64: 2>, scalar_prefetch = 0 : i64, scratch_operands = 0 : i64, tpu.core_type = #tpu.core_type<tc>, window_params = [{transform_indices = @transform_0, window_bounds = array<i64: 1, 16, 48>}, {transform_indices = @transform_1, window_bounds = array<i64: 1, 16, 48>}, {pipeline_mode = #tpu.pipeline_mode<synchronous>, transform_indices = @transform_2, window_bounds = array<i64: 10, 16>}, {pipeline_mode = #tpu.pipeline_mode<synchronous>, transform_indices = @transform_3, window_bounds = array<i64: 48, 30>}, {transform_indices = @transform_4, window_bounds = array<i64: 1, 8, 128>}]} {
    %c0 = arith.constant 0 : index
    %c0_0 = arith.constant 0 : index
    %c0_1 = arith.constant 0 : index
    %0 = vector.load %arg1[%c0, %c0_0, %c0_1] : memref<1x16x48xf32, #tpu.memory_space<vmem>>, vector<1x16x48xf32>
    %1 = vector.shape_cast %0 : vector<1x16x48xf32> to vector<16x48xf32>
    %c0_2 = arith.constant 0 : index
    %c0_3 = arith.constant 0 : index
    %c0_4 = arith.constant 0 : index
    %2 = vector.load %arg2[%c0_2, %c0_3, %c0_4] : memref<1x16x48xf32, #tpu.memory_space<vmem>>, vector<1x16x48xf32>
    %3 = vector.shape_cast %2 : vector<1x16x48xf32> to vector<16x48xf32>
    %c0_5 = arith.constant 0 : index
    %c0_6 = arith.constant 0 : index
    %4 = vector.load %arg3[%c0_5, %c0_6] : memref<10x16xf32, #tpu.memory_space<vmem>>, vector<10x16xf32>
    %c0_7 = arith.constant 0 : index
    %c0_8 = arith.constant 0 : index
    %5 = vector.load %arg4[%c0_7, %c0_8] : memref<48x30xf32, #tpu.memory_space<vmem>>, vector<48x30xf32>
    %6 = arith.mulf %1, %1 : vector<16x48xf32>
    %7 = arith.mulf %3, %3 : vector<16x48xf32>
    %8 = arith.mulf %1, %3 : vector<16x48xf32>
    %9 = tpu.concatenate %1, %3, %6, %7, %8 in 1 : vector<16x48xf32>, vector<16x48xf32>, vector<16x48xf32>, vector<16x48xf32>, vector<16x48xf32> -> vector<16x240xf32>
    %cst = arith.constant dense<0.000000e+00> : vector<10x240xf32>
    %10 = tpu.matmul %4, %9, %cst {dimension_numbers = #tpu.dot_dimension_numbers<[1], [0], [0], [1], [0, 0, 1, 1], [], []>} : vector<10x16xf32>, vector<16x240xf32>, vector<10x240xf32> -> vector<10x240xf32>
    %11 = vector.extract_strided_slice %10 {offsets = [0, 0], sizes = [10, 48], strides = [1, 1]} : vector<10x240xf32> to vector<10x48xf32>
    %cst_9 = arith.constant dense<0.000000e+00> : vector<10x30xf32>
    %12 = tpu.matmul %11, %5, %cst_9 {dimension_numbers = #tpu.dot_dimension_numbers<[1], [0], [0], [1], [0, 0, 1, 1], [], []>} : vector<10x48xf32>, vector<48x30xf32>, vector<10x30xf32> -> vector<10x30xf32>
    %13 = vector.extract_strided_slice %10 {offsets = [0, 48], sizes = [10, 48], strides = [1, 1]} : vector<10x240xf32> to vector<10x48xf32>
    %cst_10 = arith.constant dense<0.000000e+00> : vector<10x30xf32>
    %14 = tpu.matmul %13, %5, %cst_10 {dimension_numbers = #tpu.dot_dimension_numbers<[1], [0], [0], [1], [0, 0, 1, 1], [], []>} : vector<10x48xf32>, vector<48x30xf32>, vector<10x30xf32> -> vector<10x30xf32>
    %15 = vector.extract_strided_slice %10 {offsets = [0, 96], sizes = [10, 48], strides = [1, 1]} : vector<10x240xf32> to vector<10x48xf32>
    %cst_11 = arith.constant dense<0.000000e+00> : vector<10x30xf32>
    %16 = tpu.matmul %15, %5, %cst_11 {dimension_numbers = #tpu.dot_dimension_numbers<[1], [0], [0], [1], [0, 0, 1, 1], [], []>} : vector<10x48xf32>, vector<48x30xf32>, vector<10x30xf32> -> vector<10x30xf32>
    %17 = vector.extract_strided_slice %10 {offsets = [0, 144], sizes = [10, 48], strides = [1, 1]} : vector<10x240xf32> to vector<10x48xf32>
    %cst_12 = arith.constant dense<0.000000e+00> : vector<10x30xf32>
    %18 = tpu.matmul %17, %5, %cst_12 {dimension_numbers = #tpu.dot_dimension_numbers<[1], [0], [0], [1], [0, 0, 1, 1], [], []>} : vector<10x48xf32>, vector<48x30xf32>, vector<10x30xf32> -> vector<10x30xf32>
    %19 = vector.extract_strided_slice %10 {offsets = [0, 192], sizes = [10, 48], strides = [1, 1]} : vector<10x240xf32> to vector<10x48xf32>
    %cst_13 = arith.constant dense<0.000000e+00> : vector<10x30xf32>
    %20 = tpu.matmul %19, %5, %cst_13 {dimension_numbers = #tpu.dot_dimension_numbers<[1], [0], [0], [1], [0, 0, 1, 1], [], []>} : vector<10x48xf32>, vector<48x30xf32>, vector<10x30xf32> -> vector<10x30xf32>
    %21 = arith.mulf %12, %12 : vector<10x30xf32>
    %22 = arith.mulf %14, %14 : vector<10x30xf32>
    %23 = arith.mulf %12, %14 : vector<10x30xf32>
    %24 = arith.subf %16, %21 : vector<10x30xf32>
    %25 = arith.subf %18, %22 : vector<10x30xf32>
    %26 = arith.subf %20, %23 : vector<10x30xf32>
    %cst_14 = arith.constant 2.000000e+00 : f32
    %27 = vector.broadcast %cst_14 : f32 to vector<10x30xf32>
    %28 = arith.mulf %27, %26 : vector<10x30xf32>
    %cst_15 = arith.constant 8.99999984E-4 : f32
    %29 = vector.broadcast %cst_15 : f32 to vector<10x30xf32>
    %30 = arith.addf %28, %29 : vector<10x30xf32>
    %31 = arith.addf %24, %25 : vector<10x30xf32>
    %cst_16 = arith.constant 8.99999984E-4 : f32
    %32 = vector.broadcast %cst_16 : f32 to vector<10x30xf32>
    %33 = arith.addf %31, %32 : vector<10x30xf32>
    %34 = tpu.reciprocal %33 {approx = true} : vector<10x30xf32> -> vector<10x30xf32>
    %35 = arith.mulf %30, %34 : vector<10x30xf32>
    %cst_17 = arith.constant 2.000000e+00 : f32
    %36 = vector.broadcast %cst_17 : f32 to vector<10x30xf32>
    %37 = arith.mulf %36, %23 : vector<10x30xf32>
    %cst_18 = arith.constant 9.99999974E-5 : f32
    %38 = vector.broadcast %cst_18 : f32 to vector<10x30xf32>
    %39 = arith.addf %37, %38 : vector<10x30xf32>
    %40 = arith.addf %21, %22 : vector<10x30xf32>
    %cst_19 = arith.constant 9.99999974E-5 : f32
    %41 = vector.broadcast %cst_19 : f32 to vector<10x30xf32>
    %42 = arith.addf %40, %41 : vector<10x30xf32>
    %43 = tpu.reciprocal %42 {approx = true} : vector<10x30xf32> -> vector<10x30xf32>
    %44 = arith.mulf %39, %43 : vector<10x30xf32>
    %45 = arith.mulf %44, %35 : vector<10x30xf32>
    %46 = vector.shape_cast %45 : vector<10x30xf32> to vector<1x10x30xf32>
    %cst_20 = arith.constant dense<0.000000e+00> : vector<1xf32>
    %47 = vector.multi_reduction <add>, %46, %cst_20 [1, 2] : vector<1x10x30xf32> to vector<1xf32>
    %48 = vector.shape_cast %47 : vector<1xf32> to vector<1x1x1xf32>
    %49 = vector.extract %48[0, 0, 0] : f32 from vector<1x1x1xf32>
    %50 = vector.broadcast %49 : f32 to vector<1x8x128xf32>
    %c0_21 = arith.constant 0 : index
    %c0_22 = arith.constant 0 : index
    %c0_23 = arith.constant 0 : index
    %51 = vector.load %arg5[%c0_21, %c0_22, %c0_23] : memref<1x8x128xf32, #tpu.memory_space<vmem>>, vector<1x8x128xf32>
    tpu.vector_store %arg5[%c0_21, %c0_22, %c0_23], %50 {strides = array<i32>} : memref<1x8x128xf32, #tpu.memory_space<vmem>>, vector<1x8x128xf32>,
    return
  }
  func.func @transform_0(%arg0: i32) -> (i32, i32, i32) {
    %c0_i32 = arith.constant 0 : i32
    %c0_i32_0 = arith.constant 0 : i32
    %c0_i32_1 = arith.constant 0 : i32
    return %arg0, %c0_i32, %c0_i32_0 : i32, i32, i32
  }
  func.func @transform_1(%arg0: i32) -> (i32, i32, i32) {
    %c0_i32 = arith.constant 0 : i32
    %c0_i32_0 = arith.constant 0 : i32
    %c0_i32_1 = arith.constant 0 : i32
    return %arg0, %c0_i32, %c0_i32_0 : i32, i32, i32
  }
  func.func @transform_2(%arg0: i32) -> (i32, i32) {
    %c0_i32 = arith.constant 0 : i32
    %c0_i32_0 = arith.constant 0 : i32
    %c0_i32_1 = arith.constant 0 : i32
    return %c0_i32, %c0_i32_0 : i32, i32
  }
  func.func @transform_3(%arg0: i32) -> (i32, i32) {
    %c0_i32 = arith.constant 0 : i32
    %c0_i32_0 = arith.constant 0 : i32
    %c0_i32_1 = arith.constant 0 : i32
    return %c0_i32, %c0_i32_0 : i32, i32
  }
  func.func @transform_4(%arg0: i32) -> (i32, i32, i32) {
    %c0_i32 = arith.constant 0 : i32
    %c0_i32_0 = arith.constant 0 : i32
    %c0_i32_1 = arith.constant 0 : i32
    return %arg0, %c0_i32, %c0_i32_0 : i32, i32, i32
  }
}

</mosaic_0001>

<llo_original>
// kernel: tpu_custom_call.1
$region0: #{tpu_custom_call.1}
  #allocation0 [shape = 'u32[]', space=smem, size = 0x4, offset = 0x4, fixed_abs, tag = 'smem constant byte address 0x4 - core index']
  #allocation1 [shape = 'u32[144,128]{1,0:T(1,128)}', space=vmem, size = 0x12000, scoped, tag = 'internal scratch']
  %s0 = inlined_call_operand.vmem [shape: f32[2,16,48], index: 0, kind: input, shape index: {}]
  %s1 = inlined_call_operand.vmem [shape: f32[2,16,48], index: 1, kind: input, shape index: {}]
  %s2 = inlined_call_operand.vmem [shape: f32[10,16], index: 2, kind: input, shape index: {}]
  %s3 = inlined_call_operand.vmem [shape: f32[48,30], index: 3, kind: input, shape index: {}]
  %s4 = inlined_call_operand.hbm [shape: f32[2,8,128], index: 4, kind: output, shape index: {}]
  %s5 = sld [smem:[#allocation0]]
  $region49: #{tpu_custom_call.1} parent=0
    _
  %s7 = ssub.s32 1, %s5
  %s8 = scalar_select 0, %s7, %s5
  $region1: #{tpu_custom_call.1} parent=0
    #allocation2 [shape = 'u8[8192]{0}', space=vmem, size = 0x2000, scoped, tag = 'output window, operand 0']
    #allocation3 [shape = 's32[2]{0}', space=sflag, size = 0x8, scoped, tag = 'scoped memory for tpu_custom_call.1']
    %9 = vsyncpa [#allocation3], 0
    %s10 = scalar_lea.sflag [#allocation3], 1
    %11 = vsyncpa %s10, 0
    loop: start=0, step=1, limit=4
    $region2: #{tpu_custom_call.1} parent=1 // loop_pre_header
      _
    $region3: #{tpu_custom_call.1} parent=1 // loop_header
      %s13 = sphi 0, %s17
      %p14 = scmp.ge.s32.totalorder %s13, 4
      %s23 = sphi 0, %s25
      %s26 = sphi 0, %s23
      %s27 = sphi 0, %s26
      %s43 = sphi 0, %s27
      %s49 = sphi 0, %s51
      %s52 = sphi 0, %s49
      %s53 = sphi 0, %s52
      %s69 = sphi 0, %s53
      %s73 = sphi 0, %s73
      %s75 = sphi 0, %s73
      %s76 = sphi 0, %s75
      %s90 = sphi 0, %s76
      %s94 = sphi 0, %s94
      %s96 = sphi 0, %s94
      %s97 = sphi 0, %s96
      %s111 = sphi 0, %s97
      %s117 = sphi 0, %s119
      %s120 = sphi 0, %s117
      %s121 = sphi 0, %s120
      %s137 = sphi 0, %s121
    $region4: #{tpu_custom_call.1} parent=1 // loop_header_branch
      %16 = sbr.rel (%p14) target = $region8
    $region5: #{tpu_custom_call.1} parent=1 // loop_body
      %s18 = ssub.s32 %s13, 1
      %s19 = ssub.s32 %s13, 2
      %s20 = sadd.s32 %s13, 1
      %s21 = ssub.s32 %s13, %s20
      %p22 = scmp.eq.s32.totalorder %s21, 0
      %s24 = sadd.s32 %s23, 1
      %s25 = scalar_select %p22, %s23, %s24
      %p28 = pneg %p22
      %p29 = scmp.eq.s32.totalorder %s13, 1
      %p30 = por %p28, %p29
      %p31 = scmp.ne.s32.totalorder %s23, %s26
      %p32 = scmp.eq.s32.totalorder %s13, 0
      %p33 = por %p31, %p32
      %p34 = scmp.ne.s32.totalorder %s23, %s26
      %p35 = scmp.eq.s32.totalorder %s18, 1
      %p36 = por %p34, %p35
      %p37 = scmp.ne.s32.totalorder %s26, %s27
      %p38 = scmp.eq.s32.totalorder %s18, 0
      %p39 = por %p37, %p38
      %p40 = scmp.ne.s32.totalorder %s26, %s27
      %p41 = scmp.eq.s32.totalorder %s19, 1
      %p42 = por %p40, %p41
      %p44 = scmp.ne.s32.totalorder %s27, %s43
      %p45 = scmp.eq.s32.totalorder %s19, 0
      %p46 = por %p44, %p45
      %s47 = ssub.s32 %s13, %s20
      %p48 = scmp.eq.s32.totalorder %s47, 0
      %s50 = sadd.s32 %s49, 1
      %s51 = scalar_select %p48, %s49, %s50
      %p54 = pneg %p48
      %p55 = scmp.eq.s32.totalorder %s13, 1
      %p56 = por %p54, %p55
      %p57 = scmp.ne.s32.totalorder %s49, %s52
      %p58 = scmp.eq.s32.totalorder %s13, 0
      %p59 = por %p57, %p58
      %p60 = scmp.ne.s32.totalorder %s49, %s52
      %p61 = scmp.eq.s32.totalorder %s18, 1
      %p62 = por %p60, %p61
      %p63 = scmp.ne.s32.totalorder %s52, %s53
      %p64 = scmp.eq.s32.totalorder %s18, 0
      %p65 = por %p63, %p64
      %p66 = scmp.ne.s32.totalorder %s52, %s53
      %p67 = scmp.eq.s32.totalorder %s19, 1
      %p68 = por %p66, %p67
      %p70 = scmp.ne.s32.totalorder %s53, %s69
      %p71 = scmp.eq.s32.totalorder %s19, 0
      %p72 = por %p70, %p71
      %s74 = sadd.s32 %s73, 1
      %p77 = scmp.eq.s32.totalorder %s13, 1
      %p78 = scmp.ne.s32.totalorder %s73, %s75
      %p79 = scmp.eq.s32.totalorder %s13, 0
      %p80 = por %p78, %p79
      %p81 = scmp.ne.s32.totalorder %s73, %s75
      %p82 = scmp.eq.s32.totalorder %s18, 1
      %p83 = por %p81, %p82
      %p84 = scmp.ne.s32.totalorder %s75, %s76
      %p85 = scmp.eq.s32.totalorder %s18, 0
      %p86 = por %p84, %p85
      %p87 = scmp.ne.s32.totalorder %s75, %s76
      %p88 = scmp.eq.s32.totalorder %s19, 1
      %p89 = por %p87, %p88
      %p91 = scmp.ne.s32.totalorder %s76, %s90
      %p92 = scmp.eq.s32.totalorder %s19, 0
      %p93 = por %p91, %p92
      %s95 = sadd.s32 %s94, 1
      %p98 = scmp.eq.s32.totalorder %s13, 1
      %p99 = scmp.ne.s32.totalorder %s94, %s96
      %p100 = scmp.eq.s32.totalorder %s13, 0
      %p101 = por %p99, %p100
      %p102 = scmp.ne.s32.totalorder %s94, %s96
      %p103 = scmp.eq.s32.totalorder %s18, 1
      %p104 = por %p102, %p103
      %p105 = scmp.ne.s32.totalorder %s96, %s97
      %p106 = scmp.eq.s32.totalorder %s18, 0
      %p107 = por %p105, %p106
      %p108 = scmp.ne.s32.totalorder %s96, %s97
      %p109 = scmp.eq.s32.totalorder %s19, 1
      %p110 = por %p108, %p109
      %p112 = scmp.ne.s32.totalorder %s97, %s111
      %p113 = scmp.eq.s32.totalorder %s19, 0
      %p114 = por %p112, %p113
      %s115 = ssub.s32 %s13, %s20
      %p116 = scmp.eq.s32.totalorder %s115, 0
      %s118 = sadd.s32 %s117, 1
      %s119 = scalar_select %p116, %s117, %s118
      %p122 = pneg %p116
      %p123 = scmp.eq.s32.totalorder %s13, 1
      %p124 = por %p122, %p123
      %p125 = scmp.ne.s32.totalorder %s117, %s120
      %p126 = scmp.eq.s32.totalorder %s13, 0
      %p127 = por %p125, %p126
      %p128 = scmp.ne.s32.totalorder %s117, %s120
      %p129 = scmp.eq.s32.totalorder %s18, 1
      %p130 = por %p128, %p129
      %p131 = scmp.ne.s32.totalorder %s120, %s121
      %p132 = scmp.eq.s32.totalorder %s18, 0
      %p133 = por %p131, %p132
      %p134 = scmp.ne.s32.totalorder %s120, %s121
      %p135 = scmp.eq.s32.totalorder %s19, 1
      %p136 = por %p134, %p135
      %p138 = scmp.ne.s32.totalorder %s121, %s137
      %p139 = scmp.eq.s32.totalorder %s19, 0
      %p140 = por %p138, %p139
      %p141 = scmp.le.s32.totalorder 1, %s13
      %p142 = scmp.lt.s32.totalorder %s13, 3
      %p143 = pnand %p141, %p142
      %p144 = pneg %p143
      // Predicated region
      $region9: #{tpu_custom_call.1} parent=5 // pred_check
        _
      $region10: #{tpu_custom_call.1} parent=5 // pred_check_branch
        %146 = sbr.rel (%p143) target = $region12
      $region11: #{tpu_custom_call.1} parent=5 // pred_region
        %s147 = ssub.s32 %s13, 1
        // Predicated region
        $region13: #{tpu_custom_call.1} parent=11 // pred_check
          %p148 = pneg %p86
        $region14: #{tpu_custom_call.1} parent=11 // pred_check_branch
          %150 = sbr.rel (%p148) target = $region16
        $region15: #{tpu_custom_call.1} parent=11 // pred_region
          _
        $region16: #{tpu_custom_call.1} parent=11 // pred_fallthru
          _
        // Predicated region
        $region17: #{tpu_custom_call.1} parent=11 // pred_check
          %p151 = pneg %p107
        $region18: #{tpu_custom_call.1} parent=11 // pred_check_branch
          %153 = sbr.rel (%p151) target = $region20
        $region19: #{tpu_custom_call.1} parent=11 // pred_region
          _
        $region20: #{tpu_custom_call.1} parent=11 // pred_fallthru
          _
      $region12: #{tpu_custom_call.1} parent=5 // pred_fallthru
        _
      %p154 = scmp.lt.s32.totalorder %s13, 2
      // Predicated region
      $region21: #{tpu_custom_call.1} parent=5 // pred_check
        %p155 = pneg %p154
      $region22: #{tpu_custom_call.1} parent=5 // pred_check_branch
        %157 = sbr.rel (%p155) target = $region24
      $region23: #{tpu_custom_call.1} parent=5 // pred_region
        // Predicated region
        $region25: #{tpu_custom_call.1} parent=23 // pred_check
          %p158 = pneg %p33
        $region26: #{tpu_custom_call.1} parent=23 // pred_check_branch
          %160 = sbr.rel (%p158) target = $region28
        $region27: #{tpu_custom_call.1} parent=23 // pred_region
          %p161 = scmp.lt.s32.totalorder %s13, 1
          %s162 = scalar_select %p161, %s13, 1
          %s163 = smul.addr %s162, 2
          %s164 = smul.addr %s163, 8
          %s165 = scalar_lea.vmem %s0, %s164
        $region28: #{tpu_custom_call.1} parent=23 // pred_fallthru
          _
        // Predicated region
        $region29: #{tpu_custom_call.1} parent=23 // pred_check
          %p166 = pneg %p59
        $region30: #{tpu_custom_call.1} parent=23 // pred_check_branch
          %168 = sbr.rel (%p166) target = $region32
        $region31: #{tpu_custom_call.1} parent=23 // pred_region
          %p169 = scmp.lt.s32.totalorder %s13, 1
          %s170 = scalar_select %p169, %s13, 1
          %s171 = smul.addr %s170, 2
          %s172 = smul.addr %s171, 8
          %s173 = scalar_lea.vmem %s1, %s172
        $region32: #{tpu_custom_call.1} parent=23 // pred_fallthru
          _
      $region24: #{tpu_custom_call.1} parent=5 // pred_fallthru
        _
      %p174 = scmp.le.s32.totalorder 1, %s13
      %p175 = scmp.lt.s32.totalorder %s13, 3
      %p176 = pnand %p174, %p175
      %p177 = pneg %p176
      // Predicated region
      $region33: #{tpu_custom_call.1} parent=5 // pred_check
        _
      $region34: #{tpu_custom_call.1} parent=5 // pred_check_branch
        %179 = sbr.rel (%p176) target = $region36
      $region35: #{tpu_custom_call.1} parent=5 // pred_region
        %s180 = ssub.s32 %s13, 1
        %p181 = scmp.lt.s32.totalorder %s18, 1
        %s182 = scalar_select %p181, %s18, 1
        %s183 = smul.addr %s182, 2
        %s184 = smul.addr %s183, 8
        %s185 = scalar_lea.vmem %s0, %s184
        %p186 = pneg %p39
        %p187 = pneg %p36
        %p188 = scmp.lt.s32.totalorder %s18, 1
        %s189 = scalar_select %p188, %s18, 1
        %s190 = smul.addr %s189, 2
        %s191 = smul.addr %s190, 8
        %s192 = scalar_lea.vmem %s1, %s191
        %p193 = pneg %p65
        %p194 = pneg %p62
        %p195 = pneg %p86
        %p196 = pneg %p83
        %p197 = pneg %p107
        %p198 = pneg %p104
        %p199 = pneg %p133
        %p200 = pneg %p130
        %s201 = sand.u32 %s120, 1
        %s202 = scalar_lea.sflag [#allocation3], %s201
        %s203 = sand.u32 %s120, 1
        %s204 = smul.addr %s203, 8
        %s205 = scalar_lea.vmem [#allocation2], %s204
        %p206 = scmp.lt.s32.totalorder %s18, 1
        %s207 = scalar_select %p206, %s18, 1
        %s208 = smul.addr %s207, 2
        %s209 = smul.addr %s208, 8
        %s210 = scalar_lea.vmem %s0, %s209
        %p211 = scmp.lt.s32.totalorder %s18, 1
        %s212 = scalar_select %p211, %s18, 1
        %s213 = smul.addr %s212, 2
        %s214 = smul.addr %s213, 8
        %s215 = scalar_lea.vmem %s1, %s214
        %v216 = vld [vmem:[%s210] sm:$0xff]
        %v217 = vld [vmem:[%s210 + $0x8] sm:$0xff]
        %v218 = vld [vmem:[%s215] sm:$0xff]
        %v219 = vld [vmem:[%s215 + $0x8] sm:$0xff]
        %v220 = vld [vmem:[%s2] sm:$0xff]
        %v221 = vld [vmem:[%s2 + $0x8] sm:$0x3]
        %v222 = vld [vmem:[%s3] sm:$0xff]
        %v223 = vld [vmem:[%s3 + $0x8] sm:$0xff]
        %v224 = vld [vmem:[%s3 + $0x10] sm:$0xff]
        %v225 = vld [vmem:[%s3 + $0x18] sm:$0xff]
        %v226 = vld [vmem:[%s3 + $0x20] sm:$0xff]
        %v227 = vld [vmem:[%s3 + $0x28] sm:$0xff]
        %v228 = vmul.f32 %v216, %v216
        %v229 = vmul.f32 %v217, %v217
        %v230 = vmul.f32 %v218, %v218
        %v231 = vmul.f32 %v219, %v219
        %v232 = vmul.f32 %v216, %v218
        %v233 = vmul.f32 %v217, %v219
        %236 = vrot.lane.b32.xlu0 %v218, 48
        %v237 = vpop.permute.xlu0 %236
        %238 = vrot.lane.b32.xlu0 %v219, 48
        %v239 = vpop.permute.xlu0 %238
        %244 = vrot.lane.b32.xlu0 %v228, 96
        %v245 = vpop.permute.xlu0 %244
        %246 = vrot.lane.b32.xlu0 %v229, 96
        %v247 = vpop.permute.xlu0 %246
        %252 = vrot.lane.b32.xlu0 %v230, 16
        %v253 = vpop.permute.xlu0 %252
        %254 = vrot.lane.b32.xlu0 %v231, 16
        %v255 = vpop.permute.xlu0 %254
        %260 = vrot.lane.b32.xlu0 %v232, 64
        %v261 = vpop.permute.xlu0 %260
        %262 = vrot.lane.b32.xlu0 %v233, 64
        %v263 = vpop.permute.xlu0 %262
        %vm266 = vcmask 392192
        %v267 = vsel %vm266, %v216, %v237
        %v268 = vsel %vm266, %v217, %v239
        %vm269 = vcmask 785408
        %v270 = vsel %vm269, %v267, %v245
        %v271 = vsel %vm269, %v268, %v247
        %vm272 = vcmask 130048
        %v273 = vsel %vm272, %v245, %v253
        %v274 = vsel %vm272, %v247, %v255
        %vm275 = vcmask 523264
        %v276 = vsel %vm275, %v273, %v261
        %v277 = vsel %vm275, %v274, %v263
        %v279 = vsel %vm272, %v220, 0
        %v282 = vsel %vm272, %v221, 0
        %284 = vmatprep.subr.mxu0 0.0
        %285 = vmatpush1.msra.mxu0 0.0
        %286 = vmatprep.subr.mxu0 0.0
        %287 = vmatpush1.msra.mxu0 0.0
        %288 = vmatprep.subr.mxu0 0.0
        %289 = vmatpush1.msra.mxu0 0.0
        %290 = vmatprep.subr.mxu0 0.0
        %291 = vmatpush1.msra.mxu0 0.0
        %292 = vmatprep.subr.mxu0 0.0
        %293 = vmatpush1.msra.mxu0 0.0
        %294 = vmatprep.subr.mxu0 0.0
        %295 = vmatpush1.msra.mxu0 0.0
        %296 = vmatprep.subr.mxu0 0.0
        %297 = vmatpush1.msra.mxu0 0.0
        %298 = vmatprep.subr.mxu0 0.0
        %299 = vmatpush1.msra.mxu0 0.0
        %300 = vmatprep.subr.mxu0 0.0
        %301 = vmatpush1.msra.mxu0 0.0
        %302 = vmatprep.subr.mxu0 0.0
        %303 = vmatpush1.msra.mxu0 0.0
        %304 = vmatprep.subr.mxu0 0.0
        %305 = vmatpush1.msra.mxu0 0.0
        %306 = vmatprep.subr.mxu0 0.0
        %307 = vmatpush1.msra.mxu0 0.0
        %308 = vmatprep.subr.mxu0 0.0
        %309 = vmatpush1.msra.mxu0 0.0
        %310 = vmatprep.subr.mxu0 0.0
        %311 = vmatpush1.msra.mxu0 0.0
        %312 = vmatprep.subr.mxu0 %v277
        %313 = vmatpush1.msra.mxu0 %v271
        %314 = vmatprep.subr.mxu0 %v276
        %315 = vmatpush1.msra.mxu0 %v270
        %316 = vmatprep.subr.mxu0 0.0
        %317 = vmatpush2.msra.mxu0 0.0
        %318 = vmatprep.subr.mxu0 0.0
        %319 = vmatpush2.msra.mxu0 0.0
        %320 = vmatprep.subr.mxu0 0.0
        %321 = vmatpush2.msra.mxu0 0.0
        %322 = vmatprep.subr.mxu0 0.0
        %323 = vmatpush2.msra.mxu0 0.0
        %324 = vmatprep.subr.mxu0 0.0
        %325 = vmatpush2.msra.mxu0 0.0
        %326 = vmatprep.subr.mxu0 0.0
        %327 = vmatpush2.msra.mxu0 0.0
        %328 = vmatprep.subr.mxu0 0.0
        %329 = vmatpush2.msra.mxu0 0.0
        %330 = vmatprep.subr.mxu0 0.0
        %331 = vmatpush2.msra.mxu0 0.0
        %332 = vmatprep.subr.mxu0 0.0
        %333 = vmatpush2.msra.mxu0 0.0
        %334 = vmatprep.subr.mxu0 0.0
        %335 = vmatpush2.msra.mxu0 0.0
        %336 = vmatprep.subr.mxu0 0.0
        %337 = vmatpush2.msra.mxu0 0.0
        %338 = vmatprep.subr.mxu0 0.0
        %339 = vmatpush2.msra.mxu0 0.0
        %340 = vmatprep.subr.mxu0 0.0
        %341 = vmatpush2.msra.mxu0 0.0
        %342 = vmatprep.subr.mxu0 0.0
        %343 = vmatpush2.msra.mxu0 0.0
        %344 = vmatprep.subr.mxu0 0.0
        %345 = vmatpush2.msra.mxu0 0.0
        %346 = vmatprep.subr.mxu0 0.0
        %347 = vmatpush2.msra.mxu0 0.0
        %348 = vmatprep.mubr.f32.mxu0 0.0
        %349 = vmatmul.mubr.f32.gmra.mxu0 %v279
        %v350 = vpop.f32.mrf.mxu0
        %v351 = vadd.f32 0.0, %v350
        %v352 = vpop.f32.mrf.mxu0
        %v353 = vadd.f32 0.0, %v352
        %354 = vmatprep.mubr.f32.mxu0 0.0
        %355 = vmatmul.mubr.f32.gmra.mxu0 %v282
        %v356 = vpop.f32.mrf.mxu0
        %v357 = vadd.f32 0.0, %v356
        %v358 = vpop.f32.mrf.mxu0
        %v359 = vadd.f32 0.0, %v358
        %360 = vdwg.mxu0
        %v362 = vsel %vm266, %v351, 0
        %v365 = vsel %vm266, %v357, 0
        %367 = vmatprep.subr.mxu0 0.0
        %368 = vmatpush1.msra.mxu0 0.0
        %369 = vmatprep.subr.mxu0 0.0
        %370 = vmatpush1.msra.mxu0 0.0
        %371 = vmatprep.subr.mxu0 0.0
        %372 = vmatpush1.msra.mxu0 0.0
        %373 = vmatprep.subr.mxu0 0.0
        %374 = vmatpush1.msra.mxu0 0.0
        %375 = vmatprep.subr.mxu0 0.0
        %376 = vmatpush1.msra.mxu0 0.0
        %377 = vmatprep.subr.mxu0 0.0
        %378 = vmatpush1.msra.mxu0 0.0
        %379 = vmatprep.subr.mxu0 0.0
        %380 = vmatpush1.msra.mxu0 0.0
        %381 = vmatprep.subr.mxu0 0.0
        %382 = vmatpush1.msra.mxu0 0.0
        %383 = vmatprep.subr.mxu0 0.0
        %384 = vmatpush1.msra.mxu0 0.0
        %385 = vmatprep.subr.mxu0 0.0
        %386 = vmatpush1.msra.mxu0 0.0
        %387 = vmatprep.subr.mxu0 0.0
        %388 = vmatpush1.msra.mxu0 %v227
        %389 = vmatprep.subr.mxu0 0.0
        %390 = vmatpush1.msra.mxu0 %v226
        %391 = vmatprep.subr.mxu0 0.0
        %392 = vmatpush1.msra.mxu0 %v225
        %393 = vmatprep.subr.mxu0 0.0
        %394 = vmatpush1.msra.mxu0 %v224
        %395 = vmatprep.subr.mxu0 0.0
        %396 = vmatpush1.msra.mxu0 %v223
        %397 = vmatprep.subr.mxu0 0.0
        %398 = vmatpush1.msra.mxu0 %v222
        %399 = vmatprep.subr.mxu0 0.0
        %400 = vmatpush2.msra.mxu0 0.0
        %401 = vmatprep.subr.mxu0 0.0
        %402 = vmatpush2.msra.mxu0 0.0
        %403 = vmatprep.subr.mxu0 0.0
        %404 = vmatpush2.msra.mxu0 0.0
        %405 = vmatprep.subr.mxu0 0.0
        %406 = vmatpush2.msra.mxu0 0.0
        %407 = vmatprep.subr.mxu0 0.0
        %408 = vmatpush2.msra.mxu0 0.0
        %409 = vmatprep.subr.mxu0 0.0
        %410 = vmatpush2.msra.mxu0 0.0
        %411 = vmatprep.subr.mxu0 0.0
        %412 = vmatpush2.msra.mxu0 0.0
        %413 = vmatprep.subr.mxu0 0.0
        %414 = vmatpush2.msra.mxu0 0.0
        %415 = vmatprep.subr.mxu0 0.0
        %416 = vmatpush2.msra.mxu0 0.0
        %417 = vmatprep.subr.mxu0 0.0
        %418 = vmatpush2.msra.mxu0 0.0
        %419 = vmatprep.subr.mxu0 0.0
        %420 = vmatpush2.msra.mxu0 0.0
        %421 = vmatprep.subr.mxu0 0.0
        %422 = vmatpush2.msra.mxu0 0.0
        %423 = vmatprep.subr.mxu0 0.0
        %424 = vmatpush2.msra.mxu0 0.0
        %425 = vmatprep.subr.mxu0 0.0
        %426 = vmatpush2.msra.mxu0 0.0
        %427 = vmatprep.subr.mxu0 0.0
        %428 = vmatpush2.msra.mxu0 0.0
        %429 = vmatprep.subr.mxu0 0.0
        %430 = vmatpush2.msra.mxu0 0.0
        %431 = vmatprep.mubr.f32.mxu0 0.0
        %432 = vmatmul.mubr.f32.gmra.mxu0 %v362
        %v433 = vpop.f32.mrf.mxu0
        %v434 = vadd.f32 0.0, %v433
        %v435 = vpop.f32.mrf.mxu0
        %436 = vmatprep.mubr.f32.mxu0 0.0
        %437 = vmatmul.mubr.f32.gmra.mxu0 %v365
        %v438 = vpop.f32.mrf.mxu0
        %v439 = vadd.f32 0.0, %v438
        %v440 = vpop.f32.mrf.mxu0
        %441 = vdwg.mxu0
        %442 = vrot.lane.b32.xlu0 %v351, 80
        %v443 = vpop.permute.xlu0 %442
        %444 = vrot.lane.b32.xlu0 %v357, 80
        %v445 = vpop.permute.xlu0 %444
        %v446 = vsel %vm266, %v443, 0
        %v448 = vsel %vm266, %v445, 0
        %450 = vmatprep.subr.mxu0 0.0
        %451 = vmatpush1.msra.mxu0 0.0
        %452 = vmatprep.subr.mxu0 0.0
        %453 = vmatpush1.msra.mxu0 0.0
        %454 = vmatprep.subr.mxu0 0.0
        %455 = vmatpush1.msra.mxu0 0.0
        %456 = vmatprep.subr.mxu0 0.0
        %457 = vmatpush1.msra.mxu0 0.0
        %458 = vmatprep.subr.mxu0 0.0
        %459 = vmatpush1.msra.mxu0 0.0
        %460 = vmatprep.subr.mxu0 0.0
        %461 = vmatpush1.msra.mxu0 0.0
        %462 = vmatprep.subr.mxu0 0.0
        %463 = vmatpush1.msra.mxu0 0.0
        %464 = vmatprep.subr.mxu0 0.0
        %465 = vmatpush1.msra.mxu0 0.0
        %466 = vmatprep.subr.mxu0 0.0
        %467 = vmatpush1.msra.mxu0 0.0
        %468 = vmatprep.subr.mxu0 0.0
        %469 = vmatpush1.msra.mxu0 0.0
        %470 = vmatprep.subr.mxu0 0.0
        %471 = vmatpush1.msra.mxu0 %v227
        %472 = vmatprep.subr.mxu0 0.0
        %473 = vmatpush1.msra.mxu0 %v226
        %474 = vmatprep.subr.mxu0 0.0
        %475 = vmatpush1.msra.mxu0 %v225
        %476 = vmatprep.subr.mxu0 0.0
        %477 = vmatpush1.msra.mxu0 %v224
        %478 = vmatprep.subr.mxu0 0.0
        %479 = vmatpush1.msra.mxu0 %v223
        %480 = vmatprep.subr.mxu0 0.0
        %481 = vmatpush1.msra.mxu0 %v222
        %482 = vmatprep.subr.mxu0 0.0
        %483 = vmatpush2.msra.mxu0 0.0
        %484 = vmatprep.subr.mxu0 0.0
        %485 = vmatpush2.msra.mxu0 0.0
        %486 = vmatprep.subr.mxu0 0.0
        %487 = vmatpush2.msra.mxu0 0.0
        %488 = vmatprep.subr.mxu0 0.0
        %489 = vmatpush2.msra.mxu0 0.0
        %490 = vmatprep.subr.mxu0 0.0
        %491 = vmatpush2.msra.mxu0 0.0
        %492 = vmatprep.subr.mxu0 0.0
        %493 = vmatpush2.msra.mxu0 0.0
        %494 = vmatprep.subr.mxu0 0.0
        %495 = vmatpush2.msra.mxu0 0.0
        %496 = vmatprep.subr.mxu0 0.0
        %497 = vmatpush2.msra.mxu0 0.0
        %498 = vmatprep.subr.mxu0 0.0
        %499 = vmatpush2.msra.mxu0 0.0
        %500 = vmatprep.subr.mxu0 0.0
        %501 = vmatpush2.msra.mxu0 0.0
        %502 = vmatprep.subr.mxu0 0.0
        %503 = vmatpush2.msra.mxu0 0.0
        %504 = vmatprep.subr.mxu0 0.0
        %505 = vmatpush2.msra.mxu0 0.0
        %506 = vmatprep.subr.mxu0 0.0
        %507 = vmatpush2.msra.mxu0 0.0
        %508 = vmatprep.subr.mxu0 0.0
        %509 = vmatpush2.msra.mxu0 0.0
        %510 = vmatprep.subr.mxu0 0.0
        %511 = vmatpush2.msra.mxu0 0.0
        %512 = vmatprep.subr.mxu0 0.0
        %513 = vmatpush2.msra.mxu0 0.0
        %514 = vmatprep.mubr.f32.mxu0 0.0
        %515 = vmatmul.mubr.f32.gmra.mxu0 %v446
        %v516 = vpop.f32.mrf.mxu0
        %v517 = vadd.f32 0.0, %v516
        %v518 = vpop.f32.mrf.mxu0
        %519 = vmatprep.mubr.f32.mxu0 0.0
        %520 = vmatmul.mubr.f32.gmra.mxu0 %v448
        %v521 = vpop.f32.mrf.mxu0
        %v522 = vadd.f32 0.0, %v521
        %v523 = vpop.f32.mrf.mxu0
        %524 = vdwg.mxu0
        %527 = vrot.lane.b32.xlu0 %v351, 32
        %v528 = vpop.permute.xlu0 %527
        %529 = vrot.lane.b32.xlu0 %v353, 32
        %v530 = vpop.permute.xlu0 %529
        %531 = vrot.lane.b32.xlu0 %v357, 32
        %v532 = vpop.permute.xlu0 %531
        %533 = vrot.lane.b32.xlu0 %v359, 32
        %v534 = vpop.permute.xlu0 %533
        %vm535 = vcmask 261120
        %v536 = vsel %vm535, %v528, %v530
        %v537 = vsel %vm535, %v532, %v534
        %v538 = vsel %vm266, %v536, 0
        %v540 = vsel %vm266, %v537, 0
        %542 = vmatprep.subr.mxu0 0.0
        %543 = vmatpush1.msra.mxu0 0.0
        %544 = vmatprep.subr.mxu0 0.0
        %545 = vmatpush1.msra.mxu0 0.0
        %546 = vmatprep.subr.mxu0 0.0
        %547 = vmatpush1.msra.mxu0 0.0
        %548 = vmatprep.subr.mxu0 0.0
        %549 = vmatpush1.msra.mxu0 0.0
        %550 = vmatprep.subr.mxu0 0.0
        %551 = vmatpush1.msra.mxu0 0.0
        %552 = vmatprep.subr.mxu0 0.0
        %553 = vmatpush1.msra.mxu0 0.0
        %554 = vmatprep.subr.mxu0 0.0
        %555 = vmatpush1.msra.mxu0 0.0
        %556 = vmatprep.subr.mxu0 0.0
        %557 = vmatpush1.msra.mxu0 0.0
        %558 = vmatprep.subr.mxu0 0.0
        %559 = vmatpush1.msra.mxu0 0.0
        %560 = vmatprep.subr.mxu0 0.0
        %561 = vmatpush1.msra.mxu0 0.0
        %562 = vmatprep.subr.mxu0 0.0
        %563 = vmatpush1.msra.mxu0 %v227
        %564 = vmatprep.subr.mxu0 0.0
        %565 = vmatpush1.msra.mxu0 %v226
        %566 = vmatprep.subr.mxu0 0.0
        %567 = vmatpush1.msra.mxu0 %v225
        %568 = vmatprep.subr.mxu0 0.0
        %569 = vmatpush1.msra.mxu0 %v224
        %570 = vmatprep.subr.mxu0 0.0
        %571 = vmatpush1.msra.mxu0 %v223
        %572 = vmatprep.subr.mxu0 0.0
        %573 = vmatpush1.msra.mxu0 %v222
        %574 = vmatprep.subr.mxu0 0.0
        %575 = vmatpush2.msra.mxu0 0.0
        %576 = vmatprep.subr.mxu0 0.0
        %577 = vmatpush2.msra.mxu0 0.0
        %578 = vmatprep.subr.mxu0 0.0
        %579 = vmatpush2.msra.mxu0 0.0
        %580 = vmatprep.subr.mxu0 0.0
        %581 = vmatpush2.msra.mxu0 0.0
        %582 = vmatprep.subr.mxu0 0.0
        %583 = vmatpush2.msra.mxu0 0.0
        %584 = vmatprep.subr.mxu0 0.0
        %585 = vmatpush2.msra.mxu0 0.0
        %586 = vmatprep.subr.mxu0 0.0
        %587 = vmatpush2.msra.mxu0 0.0
        %588 = vmatprep.subr.mxu0 0.0
        %589 = vmatpush2.msra.mxu0 0.0
        %590 = vmatprep.subr.mxu0 0.0
        %591 = vmatpush2.msra.mxu0 0.0
        %592 = vmatprep.subr.mxu0 0.0
        %593 = vmatpush2.msra.mxu0 0.0
        %594 = vmatprep.subr.mxu0 0.0
        %595 = vmatpush2.msra.mxu0 0.0
        %596 = vmatprep.subr.mxu0 0.0
        %597 = vmatpush2.msra.mxu0 0.0
        %598 = vmatprep.subr.mxu0 0.0
        %599 = vmatpush2.msra.mxu0 0.0
        %600 = vmatprep.subr.mxu0 0.0
        %601 = vmatpush2.msra.mxu0 0.0
        %602 = vmatprep.subr.mxu0 0.0
        %603 = vmatpush2.msra.mxu0 0.0
        %604 = vmatprep.subr.mxu0 0.0
        %605 = vmatpush2.msra.mxu0 0.0
        %606 = vmatprep.mubr.f32.mxu0 0.0
        %607 = vmatmul.mubr.f32.gmra.mxu0 %v538
        %v608 = vpop.f32.mrf.mxu0
        %v609 = vadd.f32 0.0, %v608
        %v610 = vpop.f32.mrf.mxu0
        %611 = vmatprep.mubr.f32.mxu0 0.0
        %612 = vmatmul.mubr.f32.gmra.mxu0 %v540
        %v613 = vpop.f32.mrf.mxu0
        %v614 = vadd.f32 0.0, %v613
        %v615 = vpop.f32.mrf.mxu0
        %616 = vdwg.mxu0
        %617 = vrot.lane.b32.xlu0 %v353, 112
        %v618 = vpop.permute.xlu0 %617
        %619 = vrot.lane.b32.xlu0 %v359, 112
        %v620 = vpop.permute.xlu0 %619
        %v621 = vsel %vm266, %v618, 0
        %v623 = vsel %vm266, %v620, 0
        %625 = vmatprep.subr.mxu0 0.0
        %626 = vmatpush1.msra.mxu0 0.0
        %627 = vmatprep.subr.mxu0 0.0
        %628 = vmatpush1.msra.mxu0 0.0
        %629 = vmatprep.subr.mxu0 0.0
        %630 = vmatpush1.msra.mxu0 0.0
        %631 = vmatprep.subr.mxu0 0.0
        %632 = vmatpush1.msra.mxu0 0.0
        %633 = vmatprep.subr.mxu0 0.0
        %634 = vmatpush1.msra.mxu0 0.0
        %635 = vmatprep.subr.mxu0 0.0
        %636 = vmatpush1.msra.mxu0 0.0
        %637 = vmatprep.subr.mxu0 0.0
        %638 = vmatpush1.msra.mxu0 0.0
        %639 = vmatprep.subr.mxu0 0.0
        %640 = vmatpush1.msra.mxu0 0.0
        %641 = vmatprep.subr.mxu0 0.0
        %642 = vmatpush1.msra.mxu0 0.0
        %643 = vmatprep.subr.mxu0 0.0
        %644 = vmatpush1.msra.mxu0 0.0
        %645 = vmatprep.subr.mxu0 0.0
        %646 = vmatpush1.msra.mxu0 %v227
        %647 = vmatprep.subr.mxu0 0.0
        %648 = vmatpush1.msra.mxu0 %v226
        %649 = vmatprep.subr.mxu0 0.0
        %650 = vmatpush1.msra.mxu0 %v225
        %651 = vmatprep.subr.mxu0 0.0
        %652 = vmatpush1.msra.mxu0 %v224
        %653 = vmatprep.subr.mxu0 0.0
        %654 = vmatpush1.msra.mxu0 %v223
        %655 = vmatprep.subr.mxu0 0.0
        %656 = vmatpush1.msra.mxu0 %v222
        %657 = vmatprep.subr.mxu0 0.0
        %658 = vmatpush2.msra.mxu0 0.0
        %659 = vmatprep.subr.mxu0 0.0
        %660 = vmatpush2.msra.mxu0 0.0
        %661 = vmatprep.subr.mxu0 0.0
        %662 = vmatpush2.msra.mxu0 0.0
        %663 = vmatprep.subr.mxu0 0.0
        %664 = vmatpush2.msra.mxu0 0.0
        %665 = vmatprep.subr.mxu0 0.0
        %666 = vmatpush2.msra.mxu0 0.0
        %667 = vmatprep.subr.mxu0 0.0
        %668 = vmatpush2.msra.mxu0 0.0
        %669 = vmatprep.subr.mxu0 0.0
        %670 = vmatpush2.msra.mxu0 0.0
        %671 = vmatprep.subr.mxu0 0.0
        %672 = vmatpush2.msra.mxu0 0.0
        %673 = vmatprep.subr.mxu0 0.0
        %674 = vmatpush2.msra.mxu0 0.0
        %675 = vmatprep.subr.mxu0 0.0
        %676 = vmatpush2.msra.mxu0 0.0
        %677 = vmatprep.subr.mxu0 0.0
        %678 = vmatpush2.msra.mxu0 0.0
        %679 = vmatprep.subr.mxu0 0.0
        %680 = vmatpush2.msra.mxu0 0.0
        %681 = vmatprep.subr.mxu0 0.0
        %682 = vmatpush2.msra.mxu0 0.0
        %683 = vmatprep.subr.mxu0 0.0
        %684 = vmatpush2.msra.mxu0 0.0
        %685 = vmatprep.subr.mxu0 0.0
        %686 = vmatpush2.msra.mxu0 0.0
        %687 = vmatprep.subr.mxu0 0.0
        %688 = vmatpush2.msra.mxu0 0.0
        %689 = vmatprep.mubr.f32.mxu0 0.0
        %690 = vmatmul.mubr.f32.gmra.mxu0 %v621
        %v691 = vpop.f32.mrf.mxu0
        %v692 = vadd.f32 0.0, %v691
        %v693 = vpop.f32.mrf.mxu0
        %694 = vmatprep.mubr.f32.mxu0 0.0
        %695 = vmatmul.mubr.f32.gmra.mxu0 %v623
        %v696 = vpop.f32.mrf.mxu0
        %v697 = vadd.f32 0.0, %v696
        %v698 = vpop.f32.mrf.mxu0
        %699 = vdwg.mxu0
        %700 = vrot.lane.b32.xlu0 %v353, 64
        %v701 = vpop.permute.xlu0 %700
        %702 = vrot.lane.b32.xlu0 %v359, 64
        %v703 = vpop.permute.xlu0 %702
        %v704 = vsel %vm266, %v701, 0
        %v706 = vsel %vm266, %v703, 0
        %708 = vmatprep.subr.mxu0 0.0
        %709 = vmatpush1.msra.mxu0 0.0
        %710 = vmatprep.subr.mxu0 0.0
        %711 = vmatpush1.msra.mxu0 0.0
        %712 = vmatprep.subr.mxu0 0.0
        %713 = vmatpush1.msra.mxu0 0.0
        %714 = vmatprep.subr.mxu0 0.0
        %715 = vmatpush1.msra.mxu0 0.0
        %716 = vmatprep.subr.mxu0 0.0
        %717 = vmatpush1.msra.mxu0 0.0
        %718 = vmatprep.subr.mxu0 0.0
        %719 = vmatpush1.msra.mxu0 0.0
        %720 = vmatprep.subr.mxu0 0.0
        %721 = vmatpush1.msra.mxu0 0.0
        %722 = vmatprep.subr.mxu0 0.0
        %723 = vmatpush1.msra.mxu0 0.0
        %724 = vmatprep.subr.mxu0 0.0
        %725 = vmatpush1.msra.mxu0 0.0
        %726 = vmatprep.subr.mxu0 0.0
        %727 = vmatpush1.msra.mxu0 0.0
        %728 = vmatprep.subr.mxu0 0.0
        %729 = vmatpush1.msra.mxu0 %v227
        %730 = vmatprep.subr.mxu0 0.0
        %731 = vmatpush1.msra.mxu0 %v226
        %732 = vmatprep.subr.mxu0 0.0
        %733 = vmatpush1.msra.mxu0 %v225
        %734 = vmatprep.subr.mxu0 0.0
        %735 = vmatpush1.msra.mxu0 %v224
        %736 = vmatprep.subr.mxu0 0.0
        %737 = vmatpush1.msra.mxu0 %v223
        %738 = vmatprep.subr.mxu0 0.0
        %739 = vmatpush1.msra.mxu0 %v222
        %740 = vmatprep.subr.mxu0 0.0
        %741 = vmatpush2.msra.mxu0 0.0
        %742 = vmatprep.subr.mxu0 0.0
        %743 = vmatpush2.msra.mxu0 0.0
        %744 = vmatprep.subr.mxu0 0.0
        %745 = vmatpush2.msra.mxu0 0.0
        %746 = vmatprep.subr.mxu0 0.0
        %747 = vmatpush2.msra.mxu0 0.0
        %748 = vmatprep.subr.mxu0 0.0
        %749 = vmatpush2.msra.mxu0 0.0
        %750 = vmatprep.subr.mxu0 0.0
        %751 = vmatpush2.msra.mxu0 0.0
        %752 = vmatprep.subr.mxu0 0.0
        %753 = vmatpush2.msra.mxu0 0.0
        %754 = vmatprep.subr.mxu0 0.0
        %755 = vmatpush2.msra.mxu0 0.0
        %756 = vmatprep.subr.mxu0 0.0
        %757 = vmatpush2.msra.mxu0 0.0
        %758 = vmatprep.subr.mxu0 0.0
        %759 = vmatpush2.msra.mxu0 0.0
        %760 = vmatprep.subr.mxu0 0.0
        %761 = vmatpush2.msra.mxu0 0.0
        %762 = vmatprep.subr.mxu0 0.0
        %763 = vmatpush2.msra.mxu0 0.0
        %764 = vmatprep.subr.mxu0 0.0
        %765 = vmatpush2.msra.mxu0 0.0
        %766 = vmatprep.subr.mxu0 0.0
        %767 = vmatpush2.msra.mxu0 0.0
        %768 = vmatprep.subr.mxu0 0.0
        %769 = vmatpush2.msra.mxu0 0.0
        %770 = vmatprep.subr.mxu0 0.0
        %771 = vmatpush2.msra.mxu0 0.0
        %772 = vmatprep.mubr.f32.mxu0 0.0
        %773 = vmatmul.mubr.f32.gmra.mxu0 %v704
        %v774 = vpop.f32.mrf.mxu0
        %v775 = vadd.f32 0.0, %v774
        %v776 = vpop.f32.mrf.mxu0
        %777 = vmatprep.mubr.f32.mxu0 0.0
        %778 = vmatmul.mubr.f32.gmra.mxu0 %v706
        %v779 = vpop.f32.mrf.mxu0
        %v780 = vadd.f32 0.0, %v779
        %v781 = vpop.f32.mrf.mxu0
        %782 = vdwg.mxu0
        %v783 = vmul.f32 %v434, %v434
        %v784 = vmul.f32 %v439, %v439
        %v785 = vmul.f32 %v517, %v517
        %v786 = vmul.f32 %v522, %v522
        %v787 = vmul.f32 %v434, %v517
        %v788 = vmul.f32 %v439, %v522
        %v789 = vsub.f32 %v609, %v783
        %v790 = vsub.f32 %v614, %v784
        %v791 = vsub.f32 %v692, %v785
        %v792 = vsub.f32 %v697, %v786
        %v793 = vsub.f32 %v775, %v787
        %v794 = vsub.f32 %v780, %v788
        %v795 = vmul.f32 %v793, 2.0
        %v796 = vmul.f32 %v794, 2.0
        %v797 = vadd.f32 %v795, 0.0009
        %v798 = vadd.f32 %v796, 0.0009
        %v799 = vadd.f32 %v789, %v791
        %v800 = vadd.f32 %v790, %v792
        %v801 = vadd.f32 %v799, 0.0009
        %v802 = vadd.f32 %v800, 0.0009
        %v803 = vrcp.pop %v801
        %v804 = vrcp.pop %v802
        %v805 = vmul.f32 %v797, %v803
        %v806 = vmul.f32 %v798, %v804
        %v807 = vmul.f32 %v787, 2.0
        %v808 = vmul.f32 %v788, 2.0
        %v809 = vadd.f32 %v807, 0.0001
        %v810 = vadd.f32 %v808, 0.0001
        %v811 = vadd.f32 %v783, %v785
        %v812 = vadd.f32 %v784, %v786
        %v813 = vadd.f32 %v811, 0.0001
        %v814 = vadd.f32 %v812, 0.0001
        %v815 = vrcp.pop %v813
        %v816 = vrcp.pop %v814
        %v817 = vmul.f32 %v809, %v815
        %v818 = vmul.f32 %v810, %v816
        %v819 = vmul.f32 %v817, %v805
        %v820 = vmul.f32 %v818, %v806
        %vm821 = vcmask 244736
        %v822 = vsel %vm821, %v819, 0.0
        %vm823 = vcmask 238592
        %v824 = vsel %vm823, %v820, 0.0
        %v825 = vadd.f32 %v822, %v824
        %826 = vadd.xlane.f32.xlu0 %v825
        %v827 = vpop.xlane.xlu0 %826
        %v828 = vrot.slane %v827, 4
        %v829 = vadd.f32 %v827, %v828
        %v830 = vrot.slane %v829, 2
        %v831 = vadd.f32 %v829, %v830
        %v832 = vrot.slane %v831, 1
        %v833 = vadd.f32 %v831, %v832
        %s834 = vtos %v833
        %v835 = vstv %s834
        %836 = vst [vmem:[%s205] sm:$0xff] %v835
        %s837 = sand.u32 %s120, 1
        %s838 = scalar_lea.sflag [#allocation3], %s837
        %s839 = sand.u32 %s120, 1
        %s840 = smul.addr %s839, 8
        %s841 = scalar_lea.vmem [#allocation2], %s840
        // Predicated region
        $region37: #{tpu_custom_call.1} parent=35 // pred_check
          %p842 = pneg %p130
        $region38: #{tpu_custom_call.1} parent=35 // pred_check_branch
          %844 = sbr.rel (%p842) target = $region40
        $region39: #{tpu_custom_call.1} parent=35 // pred_region
          %s846 = ssub.s32 128, 128
          %847 = vsyncadd %s838, %s846
          %s848 = smul.addr %s18, 128
          %s849 = scalar_lea.hbm %s4, %s848
          %s851 = sshll.u32 %s841, 4
          %s852 = int_to_ptr.vmem [resolvable:$true] %s851
          %854 = dma.vmem_to_hbm [thread:$0]  %s852, 128, %s849, %s838
        $region40: #{tpu_custom_call.1} parent=35 // pred_fallthru
          _
      $region36: #{tpu_custom_call.1} parent=5 // pred_fallthru
        _
      %p855 = scmp.le.s32.totalorder 2, %s13
      // Predicated region
      $region41: #{tpu_custom_call.1} parent=5 // pred_check
        %p856 = pneg %p855
      $region42: #{tpu_custom_call.1} parent=5 // pred_check_branch
        %858 = sbr.rel (%p856) target = $region44
      $region43: #{tpu_custom_call.1} parent=5 // pred_region
        %s859 = ssub.s32 %s13, 2
        // Predicated region
        $region45: #{tpu_custom_call.1} parent=43 // pred_check
          %p860 = pneg %p136
        $region46: #{tpu_custom_call.1} parent=43 // pred_check_branch
          %862 = sbr.rel (%p860) target = $region48
        $region47: #{tpu_custom_call.1} parent=43 // pred_region
          %s863 = sand.u32 %s121, 1
          %s864 = scalar_lea.sflag [#allocation3], %s863
          %s865 = sand.u32 %s121, 1
          %s866 = smul.addr %s865, 8
          %s867 = scalar_lea.vmem [#allocation2], %s866
          %868 = dma.done %s864, 128
        $region48: #{tpu_custom_call.1} parent=43 // pred_fallthru
          _
      $region44: #{tpu_custom_call.1} parent=5 // pred_fallthru
        _
    $region6: #{tpu_custom_call.1} parent=1 // loop_footer
      %s17 = sadd.s32 1, %s13
    $region7: #{tpu_custom_call.1} parent=1 // loop_footer_branch
      %12 = sbr.rel target = $region3
    $region8: #{tpu_custom_call.1} parent=1 // loop_exit
      _
    %869 = vsyncpa [#allocation3], 1
    %s870 = scalar_lea.sflag [#allocation3], 1
    %871 = vsyncpa %s870, 1

</llo_original>
